<compile_context>
chip_gen: v5e
topology: v5e:2x2
jax: 0.10.0
libtpu: 0.0.40
codegen_flags: <defaults>
</compile_context>

<pallas_src>
import jax
import jax.numpy as jnp
from jax.experimental import pallas as pl
from jax.experimental.pallas import tpu as pltpu  # noqa: F401  (TPU backend)

EPS = 1e-5


def bn_relu_kernel(x_ref, gb_ref, o_ref):
    # x_ref: [C, HW] f32 — channels on sublanes, spatial on lanes (NCHW view).
    # gb_ref: [2, C] f32 — row 0 = gamma, row 1 = beta (lane-dense).
    # o_ref: [C, HW] — same layout as the input.
    x_c_hw = x_ref[...].astype(jnp.float32)            # [C, HW]

    # One XLU transpose to the lane-dense layout: [HW, C] = [49, 128].
    x = jnp.transpose(x_c_hw, (1, 0))                  # ~7 full vregs
    hw = x.shape[0]
    inv_m = 1.0 / hw                                    # reduction count / chan

    # Two-pass batch statistics (numerically robust vs E[x^2]-E[x]^2).
    mean = jnp.sum(x, axis=0, keepdims=True) * inv_m    # [1, C]
    xc = x - mean
    var = jnp.sum(xc * xc, axis=0, keepdims=True) * inv_m  # [1, C], biased

    gamma = gb_ref[0:1, :].astype(jnp.float32)          # [1, C]
    beta = gb_ref[1:2, :].astype(jnp.float32)           # [1, C]

    # Fold normalize + affine into one per-channel scale/bias (rsqrt -> EUP).
    scale = gamma * jax.lax.rsqrt(var + EPS)            # [1, C]
    bias = beta - mean * scale                          # [1, C]

    # Lane-dense elementwise pass: mul + add + max over ~7 vregs.
    y = jnp.maximum(x * scale + bias, 0.0)              # [HW, C]

    # Transpose back so the output ref keeps the NCHW-contiguous [C, HW]
    # layout (no wrapper-side transpose / extra HBM round trip).
    o_ref[...] = jnp.transpose(y, (1, 0)).astype(o_ref.dtype)


def batchnorm_relu(x_nchw, gamma, beta):
    """x_nchw: [1, C, H, W] float32; gamma, beta: [C]."""
    N, C, H, W = x_nchw.shape
    assert N == 1, "kernel specializes the module's N=1 forward"
    HW = H * W

    # Free contiguous view (NCHW with N=1 is exactly [C, H*W]); no transpose,
    # no extra XLA launches or HBM round trips.
    x2d = x_nchw.reshape(C, HW)

    # Pack gamma/beta into one lane-dense [2, C] parameter slab (single DMA).
    gb = jnp.stack([gamma, beta]).astype(x_nchw.dtype)  # [2, C]

    # Advisory cost: ~2 reduction sweeps + normalize/affine/ReLU over C*HW,
    # ~one full read + write of the activation, C rsqrts.
    cost = pl.CostEstimate(
        flops=9 * C * HW,
        bytes_accessed=2 * C * HW * 4 + 2 * C * 4,
        transcendentals=C,
    )

    out2d = pl.pallas_call(
        bn_relu_kernel,
        out_shape=jax.ShapeDtypeStruct((C, HW), x_nchw.dtype),
        # Single grid step, full-array blocks: ~25 KB total; any grid/tiling
        # would only add per-step overhead at this size.
        in_specs=[
            pl.BlockSpec((C, HW), lambda: (0, 0)),
            pl.BlockSpec((2, C), lambda: (0, 0)),
        ],
        out_specs=pl.BlockSpec((C, HW), lambda: (0, 0)),
        cost_estimate=cost,
    )(x2d, gb)

    # Free contiguous reshape back to NCHW.
    return out2d.reshape(N, C, H, W)


if __name__ == "__main__":
    key = jax.random.PRNGKey(0)
    kx, kg, kb = jax.random.split(key, 3)

    N, C, H, W = 1, 128, 7, 7
    x = jax.random.normal(kx, (N, C, H, W), dtype=jnp.float32)

    # Nontrivial affine params so the gamma/beta path is actually validated.
    gamma = 1.0 + 0.1 * jax.random.normal(kg, (C,), dtype=jnp.float32)
    beta = 0.1 * jax.random.normal(kb, (C,), dtype=jnp.float32)

    out = jax.jit(batchnorm_relu)(x, gamma, beta)
    out = jax.block_until_ready(out)

    # Pure-JAX reference (PyTorch BatchNorm2d training-mode forward + ReLU).
    mean = jnp.mean(x, axis=(0, 2, 3), keepdims=True)
    var = jnp.mean((x - mean) ** 2, axis=(0, 2, 3), keepdims=True)
    ref = (x - mean) / jnp.sqrt(var + EPS)
    ref = ref * gamma.reshape(1, C, 1, 1) + beta.reshape(1, C, 1, 1)
    ref = jnp.maximum(ref, 0.0)

    assert out.shape == (N, C, H, W)
    assert jnp.max(jnp.abs(out - ref)) < 1e-4

    print("KERNEL_OK")
</pallas_src>

<mosaic_0001>
module attributes {stable_mosaic.version = 11 : i64} {
  func.func @bn_relu_kernel(%arg0: memref<128x49xf32, #tpu.memory_space<vmem>>, %arg1: memref<2x128xf32, #tpu.memory_space<vmem>>, %arg2: memref<128x49xf32, #tpu.memory_space<vmem>>) attributes {dimension_semantics = [], scalar_prefetch = 0 : i64, scratch_operands = 0 : i64, tpu.core_type = #tpu.core_type<tc>} {
    %c0 = arith.constant 0 : index
    %c0_0 = arith.constant 0 : index
    %0 = vector.load %arg0[%c0, %c0_0] : memref<128x49xf32, #tpu.memory_space<vmem>>, vector<128x49xf32>
    %1 = tpu.transpose %0, [1, 0] : vector<128x49xf32> -> vector<49x128xf32>
    %cst = arith.constant dense<0.000000e+00> : vector<128xf32>
    %2 = vector.multi_reduction <add>, %1, %cst [0] : vector<49x128xf32> to vector<128xf32>
    %3 = vector.shape_cast %2 : vector<128xf32> to vector<1x128xf32>
    %cst_1 = arith.constant 0.0204081628 : f32
    %4 = vector.broadcast %cst_1 : f32 to vector<1x128xf32>
    %5 = arith.mulf %3, %4 : vector<1x128xf32>
    %6 = vector.broadcast %5 : vector<1x128xf32> to vector<49x128xf32>
    %7 = arith.subf %1, %6 : vector<49x128xf32>
    %8 = arith.mulf %7, %7 : vector<49x128xf32>
    %cst_2 = arith.constant dense<0.000000e+00> : vector<128xf32>
    %9 = vector.multi_reduction <add>, %8, %cst_2 [0] : vector<49x128xf32> to vector<128xf32>
    %10 = vector.shape_cast %9 : vector<128xf32> to vector<1x128xf32>
    %cst_3 = arith.constant 0.0204081628 : f32
    %11 = vector.broadcast %cst_3 : f32 to vector<1x128xf32>
    %12 = arith.mulf %10, %11 : vector<1x128xf32>
    %c0_4 = arith.constant 0 : index
    %c0_5 = arith.constant 0 : index
    %13 = vector.load %arg1[%c0_4, %c0_5] : memref<2x128xf32, #tpu.memory_space<vmem>>, vector<1x128xf32>
    %c1 = arith.constant 1 : index
    %c0_6 = arith.constant 0 : index
    %14 = vector.load %arg1[%c1, %c0_6] : memref<2x128xf32, #tpu.memory_space<vmem>>, vector<1x128xf32>
    %cst_7 = arith.constant 9.99999974E-6 : f32
    %15 = vector.broadcast %cst_7 : f32 to vector<1x128xf32>
    %16 = arith.addf %12, %15 : vector<1x128xf32>
    %17 = math.rsqrt %16 : vector<1x128xf32>
    %18 = arith.mulf %13, %17 : vector<1x128xf32>
    %19 = arith.mulf %5, %18 : vector<1x128xf32>
    %20 = arith.subf %14, %19 : vector<1x128xf32>
    %21 = vector.broadcast %18 : vector<1x128xf32> to vector<49x128xf32>
    %22 = arith.mulf %1, %21 : vector<49x128xf32>
    %23 = vector.broadcast %20 : vector<1x128xf32> to vector<49x128xf32>
    %24 = arith.addf %22, %23 : vector<49x128xf32>
    %cst_8 = arith.constant 0.000000e+00 : f32
    %25 = vector.broadcast %cst_8 : f32 to vector<49x128xf32>
    %26 = arith.maximumf %24, %25 : vector<49x128xf32>
    %27 = tpu.transpose %26, [1, 0] : vector<49x128xf32> -> vector<128x49xf32>
    %c0_9 = arith.constant 0 : index
    %c0_10 = arith.constant 0 : index
    %28 = vector.load %arg2[%c0_9, %c0_10] : memref<128x49xf32, #tpu.memory_space<vmem>>, vector<128x49xf32>
    tpu.vector_store %arg2[%c0_9, %c0_10], %27 {strides = array<i32>} : memref<128x49xf32, #tpu.memory_space<vmem>>, vector<128x49xf32>,
    return
  }
}

</mosaic_0001>

<llo_original>
// kernel: batchnorm_relu.1
$region0: #{batchnorm_relu.1}
  #allocation0 [shape = 'u32[]', space=smem, size = 0x4, offset = 0x4, fixed_abs, tag = 'smem constant byte address 0x4 - core index']
  #allocation1 [shape = 'u32[72,128]{1,0:T(1,128)}', space=vmem, size = 0x9000, scoped, tag = 'internal scratch']
  %s0 = inlined_call_operand.vmem [shape: f32[128,49], index: 0, kind: input, shape index: {}]
  %s1 = inlined_call_operand.vmem [shape: f32[2,128], index: 1, kind: input, shape index: {}]
  %s2 = inlined_call_operand.vmem [shape: f32[128,49], index: 2, kind: output, shape index: {}]
  %s3 = sld [smem:[#allocation0]]
  $region18: #{batchnorm_relu.1} parent=0
    _
  %s5 = ssub.s32 1, %s3
  %s6 = scalar_select 0, %s5, %s3
  // Predicated region
  $region2: #{batchnorm_relu.1} parent=0 // pred_check
    _
  $region3: #{batchnorm_relu.1} parent=0 // pred_check_branch
    %8 = sbr.rel (0) target = $region5
  $region4: #{batchnorm_relu.1} parent=0 // pred_region
    _
  $region5: #{batchnorm_relu.1} parent=0 // pred_fallthru
    _
  // Predicated region
  $region6: #{batchnorm_relu.1} parent=0 // pred_check
    _
  $region7: #{batchnorm_relu.1} parent=0 // pred_check_branch
    %10 = sbr.rel (0) target = $region9
  $region8: #{batchnorm_relu.1} parent=0 // pred_region
    _
  $region9: #{batchnorm_relu.1} parent=0 // pred_fallthru
    _
  %v11 = vld [vmem:[%s0] sm:$0xff]
  %v12 = vld [vmem:[%s0 + $0x8] sm:$0xff]
  %v13 = vld [vmem:[%s0 + $0x10] sm:$0xff]
  %v14 = vld [vmem:[%s0 + $0x18] sm:$0xff]
  %v15 = vld [vmem:[%s0 + $0x20] sm:$0xff]
  %v16 = vld [vmem:[%s0 + $0x28] sm:$0xff]
  %v17 = vld [vmem:[%s0 + $0x30] sm:$0xff]
  %v18 = vld [vmem:[%s0 + $0x38] sm:$0xff]
  %v19 = vld [vmem:[%s0 + $0x40] sm:$0xff]
  %v20 = vld [vmem:[%s0 + $0x48] sm:$0xff]
  %v21 = vld [vmem:[%s0 + $0x50] sm:$0xff]
  %v22 = vld [vmem:[%s0 + $0x58] sm:$0xff]
  %v23 = vld [vmem:[%s0 + $0x60] sm:$0xff]
  %v24 = vld [vmem:[%s0 + $0x68] sm:$0xff]
  %v25 = vld [vmem:[%s0 + $0x70] sm:$0xff]
  %v26 = vld [vmem:[%s0 + $0x78] sm:$0xff]
  %27 = vxpose.xlu0.b32.start [1/16] %v11, 128
  %28 = vxpose.xlu0.b32.cont [2/16] %v12, 128
  %29 = vxpose.xlu0.b32.cont [3/16] %v13, 128
  %30 = vxpose.xlu0.b32.cont [4/16] %v14, 128
  %31 = vxpose.xlu0.b32.cont [5/16] %v15, 128
  %32 = vxpose.xlu0.b32.cont [6/16] %v16, 128
  %33 = vxpose.xlu0.b32.cont [7/16] %v17, 128
  %34 = vxpose.xlu0.b32.cont [8/16] %v18, 128
  %35 = vxpose.xlu0.b32.cont [9/16] %v19, 128
  %36 = vxpose.xlu0.b32.cont [10/16] %v20, 128
  %37 = vxpose.xlu0.b32.cont [11/16] %v21, 128
  %38 = vxpose.xlu0.b32.cont [12/16] %v22, 128
  %39 = vxpose.xlu0.b32.cont [13/16] %v23, 128
  %40 = vxpose.xlu0.b32.cont [14/16] %v24, 128
  %41 = vxpose.xlu0.b32.cont [15/16] %v25, 128
  %42 = vxpose.xlu0.b32.end [16/16] %v26, 128
  %v43 = vpop.trf.xlu0
  %v44 = vpop.trf.xlu0
  %v45 = vpop.trf.xlu0
  %v46 = vpop.trf.xlu0
  %v47 = vpop.trf.xlu0
  %v48 = vpop.trf.xlu0
  %v49 = vpop.trf.xlu0
  %v50 = vpop.trf.xlu0
  %v51 = vpop.trf.xlu0
  %v52 = vpop.trf.xlu0
  %v53 = vpop.trf.xlu0
  %v54 = vpop.trf.xlu0
  %v55 = vpop.trf.xlu0
  %v56 = vpop.trf.xlu0
  %v57 = vpop.trf.xlu0
  %v58 = vpop.trf.xlu0
  %v59 = vadd.f32 %v43, %v44
  %v60 = vadd.f32 %v59, %v45
  %v61 = vadd.f32 %v60, %v46
  %v62 = vadd.f32 %v61, %v47
  %v63 = vadd.f32 %v62, %v48
  %vm64 = vcmask 1040384
  %v65 = vsel %vm64, %v49, 0.0
  %v66 = vadd.f32 %v63, %v65
  %v67 = vrot.slane %v66, 4
  %v68 = vadd.f32 %v66, %v67
  %v69 = vrot.slane %v68, 2
  %v70 = vadd.f32 %v68, %v69
  %v71 = vrot.slane %v70, 1
  %v72 = vadd.f32 %v70, %v71
  %v73 = vmul.f32 %v72, 0.020408163
  %v74 = vsub.f32 %v43, %v73
  %v75 = vsub.f32 %v44, %v73
  %v76 = vsub.f32 %v45, %v73
  %v77 = vsub.f32 %v46, %v73
  %v78 = vsub.f32 %v47, %v73
  %v79 = vsub.f32 %v48, %v73
  %v80 = vsub.f32 %v49, %v73
  %v81 = vmul.f32 %v74, %v74
  %v82 = vmul.f32 %v75, %v75
  %v83 = vmul.f32 %v76, %v76
  %v84 = vmul.f32 %v77, %v77
  %v85 = vmul.f32 %v78, %v78
  %v86 = vmul.f32 %v79, %v79
  %v87 = vmul.f32 %v80, %v80
  %v88 = vadd.f32 %v81, %v82
  %v89 = vadd.f32 %v88, %v83
  %v90 = vadd.f32 %v89, %v84
  %v91 = vadd.f32 %v90, %v85
  %v92 = vadd.f32 %v91, %v86
  %v93 = vsel %vm64, %v87, 0.0
  %v94 = vadd.f32 %v92, %v93
  %v95 = vrot.slane %v94, 4
  %v96 = vadd.f32 %v94, %v95
  %v97 = vrot.slane %v96, 2
  %v98 = vadd.f32 %v96, %v97
  %v99 = vrot.slane %v98, 1
  %v100 = vadd.f32 %v98, %v99
  %v101 = vmul.f32 %v100, 0.020408163
  %v102 = vld [vmem:[%s1] sm:$0x1]
  %v103 = vld [vmem:[%s1 + $0x1] sm:$0x1]
  %v104 = vadd.f32 %v101, 1e-05
  %v105 = vrsqrt.pop %v104
  %v106 = vmul.f32 %v105, %v104
  %v107 = vmul.f32 %v106, %v105
  %v108 = vmul.f32 0.5, %v107
  %v109 = vsub.f32 1.5, %v108
  %v110 = vmul.f32 %v105, %v109
  %vm111 = vweird.f32 %v104
  %vm112 = vweird.f32 %v105
  %vm113 = vmor %vm111, %vm112
  %v114 = vsel %vm113, %v105, %v110
  %v115 = vmul.f32 %v102, %v114
  %v116 = vmul.f32 %v73, %v115
  %v117 = vsub.f32 %v103, %v116
  %v118 = vperm.slane %v115, 0
  %v119 = vmul.f32 %v43, %v118
  %v120 = vmul.f32 %v44, %v118
  %v121 = vmul.f32 %v45, %v118
  %v122 = vmul.f32 %v46, %v118
  %v123 = vmul.f32 %v47, %v118
  %v124 = vmul.f32 %v48, %v118
  %v125 = vmul.f32 %v49, %v118
  %v126 = vperm.slane %v117, 0
  %v127 = vadd.f32 %v119, %v126
  %v128 = vadd.f32 %v120, %v126
  %v129 = vadd.f32 %v121, %v126
  %v130 = vadd.f32 %v122, %v126
  %v131 = vadd.f32 %v123, %v126
  %v132 = vadd.f32 %v124, %v126
  %v133 = vadd.f32 %v125, %v126
  %v134 = vmax.f32 %v127, 0.0
  %v135 = vmax.f32 %v128, 0.0
  %v136 = vmax.f32 %v129, 0.0
  %v137 = vmax.f32 %v130, 0.0
  %v138 = vmax.f32 %v131, 0.0
  %v139 = vmax.f32 %v132, 0.0
  %v140 = vmax.f32 %v133, 0.0
  %141 = vxpose.xlu0.b32.start [1/16] %v134, 128
  %142 = vxpose.xlu0.b32.cont [2/16] %v135, 128
  %143 = vxpose.xlu0.b32.cont [3/16] %v136, 128
  %144 = vxpose.xlu0.b32.cont [4/16] %v137, 128
  %145 = vxpose.xlu0.b32.cont [5/16] %v138, 128
  %146 = vxpose.xlu0.b32.cont [6/16] %v139, 128
  %147 = vxpose.xlu0.b32.cont [7/16] %v140, 128
  %148 = vxpose.xlu0.b32.cont [8/16] 0.0, 128
  %149 = vxpose.xlu0.b32.cont [9/16] 0.0, 128
  %150 = vxpose.xlu0.b32.cont [10/16] 0.0, 128
  %151 = vxpose.xlu0.b32.cont [11/16] 0.0, 128
  %152 = vxpose.xlu0.b32.cont [12/16] 0.0, 128
  %153 = vxpose.xlu0.b32.cont [13/16] 0.0, 128
  %154 = vxpose.xlu0.b32.cont [14/16] 0.0, 128
  %155 = vxpose.xlu0.b32.cont [15/16] 0.0, 128
  %156 = vxpose.xlu0.b32.end [16/16] 0.0, 128
  %v157 = vpop.trf.xlu0
  %v158 = vpop.trf.xlu0
  %v159 = vpop.trf.xlu0
  %v160 = vpop.trf.xlu0
  %v161 = vpop.trf.xlu0
  %v162 = vpop.trf.xlu0
  %v163 = vpop.trf.xlu0
  %v164 = vpop.trf.xlu0
  %v165 = vpop.trf.xlu0
  %v166 = vpop.trf.xlu0
  %v167 = vpop.trf.xlu0
  %v168 = vpop.trf.xlu0
  %v169 = vpop.trf.xlu0
  %v170 = vpop.trf.xlu0
  %v171 = vpop.trf.xlu0
  %v172 = vpop.trf.xlu0
  %vm173 = vcmask 400384
  %174 = vst.msk [vmem:[%s2] sm:$0xff] %vm173, %v157
  %175 = vst.msk [vmem:[%s2 + $0x8] sm:$0xff] %vm173, %v158
  %176 = vst.msk [vmem:[%s2 + $0x10] sm:$0xff] %vm173, %v159
  %177 = vst.msk [vmem:[%s2 + $0x18] sm:$0xff] %vm173, %v160
  %178 = vst.msk [vmem:[%s2 + $0x20] sm:$0xff] %vm173, %v161
  %179 = vst.msk [vmem:[%s2 + $0x28] sm:$0xff] %vm173, %v162
  %180 = vst.msk [vmem:[%s2 + $0x30] sm:$0xff] %vm173, %v163
  %181 = vst.msk [vmem:[%s2 + $0x38] sm:$0xff] %vm173, %v164
  %182 = vst.msk [vmem:[%s2 + $0x40] sm:$0xff] %vm173, %v165
  %183 = vst.msk [vmem:[%s2 + $0x48] sm:$0xff] %vm173, %v166
  %184 = vst.msk [vmem:[%s2 + $0x50] sm:$0xff] %vm173, %v167
  %185 = vst.msk [vmem:[%s2 + $0x58] sm:$0xff] %vm173, %v168
  %186 = vst.msk [vmem:[%s2 + $0x60] sm:$0xff] %vm173, %v169
  %187 = vst.msk [vmem:[%s2 + $0x68] sm:$0xff] %vm173, %v170
  %188 = vst.msk [vmem:[%s2 + $0x70] sm:$0xff] %vm173, %v171
  %189 = vst.msk [vmem:[%s2 + $0x78] sm:$0xff] %vm173, %v172
  // Predicated region
  $region10: #{batchnorm_relu.1} parent=0 // pred_check
    _
  $region11: #{batchnorm_relu.1} parent=0 // pred_check_branch
    %191 = sbr.rel (0) target = $region13
  $region12: #{batchnorm_relu.1} parent=0 // pred_region
    _
  $region13: #{batchnorm_relu.1} parent=0 // pred_fallthru
    _
  // Predicated region
  $region14: #{batchnorm_relu.1} parent=0 // pred_check
    _
  $region15: #{batchnorm_relu.1} parent=0 // pred_check_branch
    %193 = sbr.rel (0) target = $region17
  $region16: #{batchnorm_relu.1} parent=0 // pred_region
    _
  $region17: #{batchnorm_relu.1} parent=0 // pred_fallthru
    _

</llo_original>
